<compile_context>
chip_gen: v7x
topology: tpu7x:2x2x1
jax: 0.10.0
libtpu: 0.0.40
codegen_flags: <defaults>
</compile_context>

<pallas_src>
import functools

import jax
import jax.numpy as jnp
from jax.experimental import pallas as pl
from jax.experimental.pallas import tpu as pltpu


def _f1_loss_kernel(x_ref, t_ref, out_ref,
                    tgt_acc, bce_acc, s_acc, tp_acc,
                    *, eps, n_rows, np_rows, tile_n, n_classes, pack,
                    acc_rows, ragged):
    step = pl.program_id(0)
    n_steps = pl.num_programs(0)

    # ---- init accumulators on the first grid step --------------------------
    @pl.when(step == 0)
    def _():
        tgt_acc[...] = jnp.zeros_like(tgt_acc)
        bce_acc[...] = jnp.zeros_like(bce_acc)
        s_acc[...] = jnp.zeros_like(s_acc)
        tp_acc[...] = jnp.zeros_like(tp_acc)

    def _reduce_rows(v):
        # Per-step reduction of a (tile_n, pc) block into the accumulator shape.
        if acc_rows == 8:
            # Split the sublane axis into vreg-rows and add them: pure VPU adds.
            # The 8 -> 1 cross-sublane (XLU) reduce happens once, in the epilogue.
            return v.reshape(tile_n // 8, 8, v.shape[-1]).sum(axis=0)
        return v.sum(axis=0, keepdims=True)

    def _accumulate(masked):
        x = x_ref[...].astype(jnp.float32)
        t = t_ref[...].astype(jnp.float32)
        if masked:
            row = jax.lax.broadcasted_iota(jnp.int32, (tile_n, 1), 0) + step * tile_n
            valid = row < np_rows                      # (tile_n, 1) bool
            # Sanitize BEFORE any arithmetic: padded garbage may be NaN/Inf and
            # NaN * 0 would otherwise poison the accumulators.
            x = jnp.where(valid, x, 0.0)
            t = jnp.where(valid, t, 0.0)
            mask = valid.astype(jnp.float32)

        # Shared transcendental: e = exp(-|x|).
        e = jnp.exp(-jnp.abs(x))
        # Stable BCE-with-logits: max(x,0) - x*t + log1p(exp(-|x|)).
        bce = jnp.maximum(x, 0.0) - x * t + jnp.log1p(e)
        # sigmoid(x) from the same e:  x>=0 -> 1/(1+e) ; x<0 -> e/(1+e).
        inv = pl.reciprocal(1.0 + e, approx=True)
        sig = jnp.where(x >= 0.0, inv, e * inv)
        # clamp(sig*(1-t), min=0.01) + sig*t  ==  where(t>0, sig+0.01, max(sig,0.01))
        # for hard {0,1} targets (fewer VPU ops, same semantics incl. the +0.01 quirk).
        s = jnp.where(t > 0.0, sig + 0.01, jnp.maximum(sig, 0.01))
        if masked:
            bce = bce * mask
            s = s * mask

        tgt_acc[...] += _reduce_rows(t)
        bce_acc[...] += _reduce_rows(bce)
        s_acc[...] += _reduce_rows(s)
        tp_acc[...] += _reduce_rows(s * t)

    if ragged:
        @pl.when(step == n_steps - 1)
        def _():
            _accumulate(True)

        @pl.when(step < n_steps - 1)
        def _():
            _accumulate(False)
    else:
        _accumulate(False)

    # ---- finalize on the last grid step ------------------------------------
    @pl.when(step == n_steps - 1)
    def _():
        def fold(acc):
            # (acc_rows, pack*C) -> (1, C): sublane reduce + fold packed groups.
            srow = acc[...].sum(axis=0, keepdims=True)        # (1, pack*C)
            per_cls = srow[:, 0:n_classes]
            for g in range(1, pack):
                per_cls = per_cls + srow[:, g * n_classes:(g + 1) * n_classes]
            return per_cls                                    # (1, C)

        tgt_sum = fold(tgt_acc)
        bce_sum = fold(bce_acc)
        s_sum = fold(s_acc)
        tp_sum = fold(tp_acc)

        # Exact == 0 check is safe: targets are hard {0,1} and N << 2^24.
        lack = (tgt_sum == 0.0).astype(jnp.float32)           # (1, C)
        num_lack = jnp.sum(lack)
        bce_lack = jnp.sum(bce_sum * lack)
        # torch mean over x[:, lack_cls] == sum / (N * num_lack); 0 if none lacking.
        extra = jnp.where(
            num_lack > 0.0,
            bce_lack / jnp.maximum(n_rows * num_lack, 1.0),
            0.0,
        )

        precision = tp_sum / (s_sum + eps)
        recall = tp_sum / (tgt_sum + eps)
        f1 = 2.0 * (precision * recall / (precision + recall + eps))
        out_ref[0, 0] = 1.0 - jnp.sum(f1) / n_classes + extra


def _pack_factor(n, c):
    """Largest k <= 128//c dividing n (lane-packing factor)."""
    max_k = max(1, 128 // max(c, 1))
    for k in range(max_k, 0, -1):
        if n % k == 0:
            return k
    return 1


def f1_loss(x, target, eps=1e-8, tile_n=None):
    """Pallas implementation of F1Loss.forward(x, target) -> scalar loss."""
    assert x.shape == target.shape and x.ndim == 2
    n, c = x.shape

    # ---- lane packing: (N, C) -> (N/k, k*C) (free row-major reshape) --------
    pack = _pack_factor(n, c)
    np_rows = n // pack
    pc = c * pack
    x_p = x.reshape(np_rows, pc)
    t_p = target.reshape(np_rows, pc)

    # ---- VMEM-budget-driven, generation-aware tile size ---------------------
    lane_c = ((pc + 127) // 128) * 128                  # VMEM blocks are lane-padded
    bytes_per_row = lane_c * (x.dtype.itemsize + target.dtype.itemsize)
    try:
        vmem_cap = pltpu.get_tpu_info().vmem_capacity_bytes
    except Exception:
        vmem_cap = 64 << 20                             # conservative (v7x physical)
    budget = min(int(vmem_cap * 0.6), 48 << 20)         # double-buffered footprint cap

    if tile_n is None:
        # Target ~8 MiB per input block, bounded so 2 inputs x 2 buffers fit budget.
        tile_from_block = (8 << 20) // (lane_c * max(x.dtype.itemsize,
                                                     target.dtype.itemsize))
        tile_from_budget = budget // (2 * bytes_per_row)
        tile_n = max(32, (min(tile_from_block, tile_from_budget) // 32) * 32)

    if tile_n >= np_rows:
        tile_n = np_rows                                # one block == full extent
    else:
        tile_n = max(8, (tile_n // 8) * 8)              # (8, 128) sublane rule
        if tile_n >= np_rows:
            tile_n = np_rows

    grid = (pl.cdiv(np_rows, tile_n),)
    ragged = (np_rows % tile_n) != 0
    acc_rows = 8 if (tile_n % 8 == 0) else 1

    footprint = 2 * tile_n * bytes_per_row + 4 * acc_rows * lane_c * 4
    vmem_limit = int(min(max(2 * footprint, 32 << 20), int(vmem_cap * 0.75)))

    kernel = functools.partial(
        _f1_loss_kernel, eps=eps, n_rows=n, np_rows=np_rows, tile_n=tile_n,
        n_classes=c, pack=pack, acc_rows=acc_rows, ragged=ragged)

    cost = pl.CostEstimate(
        flops=14 * n * c,
        transcendentals=3 * n * c,
        bytes_accessed=n * c * (x.dtype.itemsize + target.dtype.itemsize) + 4,
    )

    out = pl.pallas_call(
        kernel,
        out_shape=jax.ShapeDtypeStruct((1, 1), jnp.float32),
        grid=grid,
        in_specs=[
            pl.BlockSpec((tile_n, pc), lambda i: (i, 0)),
            pl.BlockSpec((tile_n, pc), lambda i: (i, 0)),
        ],
        out_specs=pl.BlockSpec((1, 1), lambda i: (0, 0), memory_space=pltpu.SMEM),
        scratch_shapes=[pltpu.VMEM((acc_rows, pc), jnp.float32) for _ in range(4)],
        compiler_params=pltpu.CompilerParams(
            dimension_semantics=("arbitrary",),          # N axis is a reduction
            vmem_limit_bytes=vmem_limit,
        ),
        cost_estimate=cost,
    )(x_p, t_p)                                          # native dtypes; widen in-kernel
    return out[0, 0]


def _f1_loss_ref(x, target, eps=1e-8):
    """Pure-JAX reference mirroring the PyTorch module (for validation)."""
    x = x.astype(jnp.float32)
    t = target.astype(jnp.float32)
    n = x.shape[0]
    tgt_sum = t.sum(axis=0)
    lack = tgt_sum == 0.0
    num_lack = jnp.sum(lack.astype(jnp.float32))
    bce = jnp.maximum(x, 0.0) - x * t + jnp.log1p(jnp.exp(-jnp.abs(x)))
    extra = jnp.where(
        num_lack > 0.0,
        jnp.sum(bce * lack[None, :].astype(jnp.float32))
        / jnp.maximum(n * num_lack, 1.0),
        0.0,
    )
    s = jax.nn.sigmoid(x)
    s = jnp.maximum(s * (1.0 - t), 0.01) + s * t
    tp = (s * t).sum(axis=0)
    precision = tp / (s.sum(axis=0) + eps)
    recall = tp / (tgt_sum + eps)
    f1 = 2.0 * (precision * recall / (precision + recall + eps))
    return 1.0 - f1.mean() + extra


if __name__ == "__main__":
    key = jax.random.PRNGKey(0)
    ks = jax.random.split(key, 8)

    # Case 1: small problem -> fully lane-packed single block (8,16) -> (1,128).
    N, C = 8, 16
    x1 = jax.random.normal(ks[0], (N, C), dtype=jnp.float32)
    t1 = jax.random.bernoulli(ks[1], 0.5, (N, C)).astype(jnp.float32)
    t1 = t1.at[:, :3].set(0.0)                 # force some "lacking" classes (BCE path)
    loss1 = f1_loss(x1, t1)
    jax.block_until_ready(loss1)
    ref1 = _f1_loss_ref(x1, t1)
    assert jnp.allclose(loss1, ref1, rtol=2e-3, atol=2e-3), (loss1, ref1)

    # Case 2: auto tile size (packing k=5, single full-extent block).
    N2, C2 = 100, 16
    x2 = jax.random.normal(ks[2], (N2, C2), dtype=jnp.float32)
    t2 = jax.random.bernoulli(ks[3], 0.3, (N2, C2)).astype(jnp.float32)
    t2 = t2.at[:, -2:].set(0.0)
    loss2 = f1_loss(x2, t2)
    jax.block_until_ready(loss2)
    ref2 = _f1_loss_ref(x2, t2)
    assert jnp.allclose(loss2, ref2, rtol=2e-3, atol=2e-3), (loss2, ref2)

    # Case 3: forced small tile -> multi-step grid with a ragged final tile
    # (exercises the fixed masked path and the (8, pc) accumulators).
    loss3 = f1_loss(x2, t2, tile_n=8)
    jax.block_until_ready(loss3)
    assert jnp.allclose(loss3, ref2, rtol=2e-3, atol=2e-3), (loss3, ref2)

    # Case 4: prime N (no lane packing) + bf16 logits (in-kernel widening).
    N4, C4 = 37, 24
    x4 = jax.random.normal(ks[4], (N4, C4), dtype=jnp.float32).astype(jnp.bfloat16)
    t4 = jax.random.bernoulli(ks[5], 0.4, (N4, C4)).astype(jnp.float32)
    t4 = t4.at[:, :1].set(0.0)
    loss4 = f1_loss(x4, t4)
    jax.block_until_ready(loss4)
    ref4 = _f1_loss_ref(x4, t4)
    assert jnp.allclose(loss4, ref4, rtol=3e-3, atol=3e-3), (loss4, ref4)

    print("KERNEL_OK")
</pallas_src>

<mosaic_0001>
module attributes {stable_mosaic.version = 11 : i64} {
  func.func @_f1_loss_kernel(%arg0: i32, %arg1: memref<1x128xf32, #tpu.memory_space<vmem>>, %arg2: memref<1x128xf32, #tpu.memory_space<vmem>>, %arg3: memref<1x1xf32, #tpu.memory_space<smem>>, %arg4: memref<1x128xf32, #tpu.memory_space<vmem>>, %arg5: memref<1x128xf32, #tpu.memory_space<vmem>>, %arg6: memref<1x128xf32, #tpu.memory_space<vmem>>, %arg7: memref<1x128xf32, #tpu.memory_space<vmem>>) attributes {dimension_semantics = [#tpu.dimension_semantics<arbitrary>], iteration_bounds = array<i64: 1>, scalar_prefetch = 0 : i64, scratch_operands = 4 : i64, tpu.core_type = #tpu.core_type<tc>, window_params = [{transform_indices = @transform_0, window_bounds = array<i64: 1, 128>}, {transform_indices = @transform_1, window_bounds = array<i64: 1, 128>}, {transform_indices = @transform_2, window_bounds = array<i64: 1, 1>}]} {
    %c0_i32 = arith.constant 0 : i32
    %0 = arith.cmpi eq, %arg0, %c0_i32 : i32
    %1 = arith.extui %0 : i1 to i32
    %c0_i32_0 = arith.constant 0 : i32
    %2 = arith.cmpi ne, %1, %c0_i32_0 : i32
    scf.if %2 {
      %cst_32 = arith.constant 0.000000e+00 : f32
      %53 = vector.broadcast %cst_32 : f32 to vector<1x128xf32>
      %c0_33 = arith.constant 0 : index
      %c0_34 = arith.constant 0 : index
      %54 = vector.load %arg4[%c0_33, %c0_34] : memref<1x128xf32, #tpu.memory_space<vmem>>, vector<1x128xf32>
      tpu.vector_store %arg4[%c0_33, %c0_34], %53 {strides = array<i32>} : memref<1x128xf32, #tpu.memory_space<vmem>>, vector<1x128xf32>,
      %cst_35 = arith.constant 0.000000e+00 : f32
      %55 = vector.broadcast %cst_35 : f32 to vector<1x128xf32>
      %c0_36 = arith.constant 0 : index
      %c0_37 = arith.constant 0 : index
      %56 = vector.load %arg5[%c0_36, %c0_37] : memref<1x128xf32, #tpu.memory_space<vmem>>, vector<1x128xf32>
      tpu.vector_store %arg5[%c0_36, %c0_37], %55 {strides = array<i32>} : memref<1x128xf32, #tpu.memory_space<vmem>>, vector<1x128xf32>,
      %cst_38 = arith.constant 0.000000e+00 : f32
      %57 = vector.broadcast %cst_38 : f32 to vector<1x128xf32>
      %c0_39 = arith.constant 0 : index
      %c0_40 = arith.constant 0 : index
      %58 = vector.load %arg6[%c0_39, %c0_40] : memref<1x128xf32, #tpu.memory_space<vmem>>, vector<1x128xf32>
      tpu.vector_store %arg6[%c0_39, %c0_40], %57 {strides = array<i32>} : memref<1x128xf32, #tpu.memory_space<vmem>>, vector<1x128xf32>,
      %cst_41 = arith.constant 0.000000e+00 : f32
      %59 = vector.broadcast %cst_41 : f32 to vector<1x128xf32>
      %c0_42 = arith.constant 0 : index
      %c0_43 = arith.constant 0 : index
      %60 = vector.load %arg7[%c0_42, %c0_43] : memref<1x128xf32, #tpu.memory_space<vmem>>, vector<1x128xf32>
      tpu.vector_store %arg7[%c0_42, %c0_43], %59 {strides = array<i32>} : memref<1x128xf32, #tpu.memory_space<vmem>>, vector<1x128xf32>,
    } else {
    }
    %c0 = arith.constant 0 : index
    %c0_1 = arith.constant 0 : index
    %3 = vector.load %arg1[%c0, %c0_1] : memref<1x128xf32, #tpu.memory_space<vmem>>, vector<1x128xf32>
    %c0_2 = arith.constant 0 : index
    %c0_3 = arith.constant 0 : index
    %4 = vector.load %arg2[%c0_2, %c0_3] : memref<1x128xf32, #tpu.memory_space<vmem>>, vector<1x128xf32>
    %5 = math.absf %3 : vector<1x128xf32>
    %cst = arith.constant 0.000000e+00 : f32
    %6 = vector.broadcast %cst : f32 to vector<1x128xf32>
    %7 = arith.subf %6, %5 : vector<1x128xf32>
    %8 = math.exp %7 : vector<1x128xf32>
    %cst_4 = arith.constant 0.000000e+00 : f32
    %9 = vector.broadcast %cst_4 : f32 to vector<1x128xf32>
    %10 = arith.maximumf %3, %9 : vector<1x128xf32>
    %11 = arith.mulf %3, %4 : vector<1x128xf32>
    %12 = arith.subf %10, %11 : vector<1x128xf32>
    %13 = math.log1p %8 : vector<1x128xf32>
    %14 = arith.addf %12, %13 : vector<1x128xf32>
    %cst_5 = arith.constant 1.000000e+00 : f32
    %15 = vector.broadcast %cst_5 : f32 to vector<1x128xf32>
    %16 = arith.addf %15, %8 : vector<1x128xf32>
    %17 = tpu.reciprocal %16 {approx = true} : vector<1x128xf32> -> vector<1x128xf32>
    %cst_6 = arith.constant 0.000000e+00 : f32
    %18 = vector.broadcast %cst_6 : f32 to vector<1x128xf32>
    %19 = arith.cmpf oge, %3, %18 : vector<1x128xf32>
    %20 = arith.mulf %8, %17 : vector<1x128xf32>
    %21 = arith.select %19, %17, %20 : vector<1x128xi1>, vector<1x128xf32>
    %cst_7 = arith.constant 0.000000e+00 : f32
    %22 = vector.broadcast %cst_7 : f32 to vector<1x128xf32>
    %23 = arith.cmpf ogt, %4, %22 : vector<1x128xf32>
    %cst_8 = arith.constant 0.00999999977 : f32
    %24 = vector.broadcast %cst_8 : f32 to vector<1x128xf32>
    %25 = arith.addf %21, %24 : vector<1x128xf32>
    %cst_9 = arith.constant 0.00999999977 : f32
    %26 = vector.broadcast %cst_9 : f32 to vector<1x128xf32>
    %27 = arith.maximumf %21, %26 : vector<1x128xf32>
    %28 = arith.select %23, %25, %27 : vector<1x128xi1>, vector<1x128xf32>
    %c0_10 = arith.constant 0 : index
    %c0_11 = arith.constant 0 : index
    %29 = vector.load %arg4[%c0_10, %c0_11] : memref<1x128xf32, #tpu.memory_space<vmem>>, vector<1x128xf32>
    %cst_12 = arith.constant dense<0.000000e+00> : vector<128xf32>
    %30 = vector.multi_reduction <add>, %4, %cst_12 [0] : vector<1x128xf32> to vector<128xf32>
    %31 = vector.shape_cast %30 : vector<128xf32> to vector<1x128xf32>
    %32 = arith.addf %29, %31 : vector<1x128xf32>
    %c0_13 = arith.constant 0 : index
    %c0_14 = arith.constant 0 : index
    %33 = vector.load %arg4[%c0_13, %c0_14] : memref<1x128xf32, #tpu.memory_space<vmem>>, vector<1x128xf32>
    tpu.vector_store %arg4[%c0_13, %c0_14], %32 {strides = array<i32>} : memref<1x128xf32, #tpu.memory_space<vmem>>, vector<1x128xf32>,
    %c0_15 = arith.constant 0 : index
    %c0_16 = arith.constant 0 : index
    %34 = vector.load %arg5[%c0_15, %c0_16] : memref<1x128xf32, #tpu.memory_space<vmem>>, vector<1x128xf32>
    %cst_17 = arith.constant dense<0.000000e+00> : vector<128xf32>
    %35 = vector.multi_reduction <add>, %14, %cst_17 [0] : vector<1x128xf32> to vector<128xf32>
    %36 = vector.shape_cast %35 : vector<128xf32> to vector<1x128xf32>
    %37 = arith.addf %34, %36 : vector<1x128xf32>
    %c0_18 = arith.constant 0 : index
    %c0_19 = arith.constant 0 : index
    %38 = vector.load %arg5[%c0_18, %c0_19] : memref<1x128xf32, #tpu.memory_space<vmem>>, vector<1x128xf32>
    tpu.vector_store %arg5[%c0_18, %c0_19], %37 {strides = array<i32>} : memref<1x128xf32, #tpu.memory_space<vmem>>, vector<1x128xf32>,
    %c0_20 = arith.constant 0 : index
    %c0_21 = arith.constant 0 : index
    %39 = vector.load %arg6[%c0_20, %c0_21] : memref<1x128xf32, #tpu.memory_space<vmem>>, vector<1x128xf32>
    %cst_22 = arith.constant dense<0.000000e+00> : vector<128xf32>
    %40 = vector.multi_reduction <add>, %28, %cst_22 [0] : vector<1x128xf32> to vector<128xf32>
    %41 = vector.shape_cast %40 : vector<128xf32> to vector<1x128xf32>
    %42 = arith.addf %39, %41 : vector<1x128xf32>
    %c0_23 = arith.constant 0 : index
    %c0_24 = arith.constant 0 : index
    %43 = vector.load %arg6[%c0_23, %c0_24] : memref<1x128xf32, #tpu.memory_space<vmem>>, vector<1x128xf32>
    tpu.vector_store %arg6[%c0_23, %c0_24], %42 {strides = array<i32>} : memref<1x128xf32, #tpu.memory_space<vmem>>, vector<1x128xf32>,
    %c0_25 = arith.constant 0 : index
    %c0_26 = arith.constant 0 : index
    %44 = vector.load %arg7[%c0_25, %c0_26] : memref<1x128xf32, #tpu.memory_space<vmem>>, vector<1x128xf32>
    %45 = arith.mulf %28, %4 : vector<1x128xf32>
    %cst_27 = arith.constant dense<0.000000e+00> : vector<128xf32>
    %46 = vector.multi_reduction <add>, %45, %cst_27 [0] : vector<1x128xf32> to vector<128xf32>
    %47 = vector.shape_cast %46 : vector<128xf32> to vector<1x128xf32>
    %48 = arith.addf %44, %47 : vector<1x128xf32>
    %c0_28 = arith.constant 0 : index
    %c0_29 = arith.constant 0 : index
    %49 = vector.load %arg7[%c0_28, %c0_29] : memref<1x128xf32, #tpu.memory_space<vmem>>, vector<1x128xf32>
    tpu.vector_store %arg7[%c0_28, %c0_29], %48 {strides = array<i32>} : memref<1x128xf32, #tpu.memory_space<vmem>>, vector<1x128xf32>,
    %c0_i32_30 = arith.constant 0 : i32
    %50 = arith.cmpi eq, %arg0, %c0_i32_30 : i32
    %51 = arith.extui %50 : i1 to i32
    %c0_i32_31 = arith.constant 0 : i32
    %52 = arith.cmpi ne, %51, %c0_i32_31 : i32
    scf.if %52 {
      %c0_32 = arith.constant 0 : index
      %c0_33 = arith.constant 0 : index
      %53 = vector.load %arg4[%c0_32, %c0_33] : memref<1x128xf32, #tpu.memory_space<vmem>>, vector<1x128xf32>
      %cst_34 = arith.constant dense<0.000000e+00> : vector<128xf32>
      %54 = vector.multi_reduction <add>, %53, %cst_34 [0] : vector<1x128xf32> to vector<128xf32>
      %55 = vector.shape_cast %54 : vector<128xf32> to vector<1x128xf32>
      %56 = vector.extract_strided_slice %55 {offsets = [0, 0], sizes = [1, 16], strides = [1, 1]} : vector<1x128xf32> to vector<1x16xf32>
      %57 = vector.extract_strided_slice %55 {offsets = [0, 16], sizes = [1, 16], strides = [1, 1]} : vector<1x128xf32> to vector<1x16xf32>
      %58 = arith.addf %56, %57 : vector<1x16xf32>
      %59 = vector.extract_strided_slice %55 {offsets = [0, 32], sizes = [1, 16], strides = [1, 1]} : vector<1x128xf32> to vector<1x16xf32>
      %60 = arith.addf %58, %59 : vector<1x16xf32>
      %61 = vector.extract_strided_slice %55 {offsets = [0, 48], sizes = [1, 16], strides = [1, 1]} : vector<1x128xf32> to vector<1x16xf32>
      %62 = arith.addf %60, %61 : vector<1x16xf32>
      %63 = vector.extract_strided_slice %55 {offsets = [0, 64], sizes = [1, 16], strides = [1, 1]} : vector<1x128xf32> to vector<1x16xf32>
      %64 = arith.addf %62, %63 : vector<1x16xf32>
      %65 = vector.extract_strided_slice %55 {offsets = [0, 80], sizes = [1, 16], strides = [1, 1]} : vector<1x128xf32> to vector<1x16xf32>
      %66 = arith.addf %64, %65 : vector<1x16xf32>
      %67 = vector.extract_strided_slice %55 {offsets = [0, 96], sizes = [1, 16], strides = [1, 1]} : vector<1x128xf32> to vector<1x16xf32>
      %68 = arith.addf %66, %67 : vector<1x16xf32>
      %69 = vector.extract_strided_slice %55 {offsets = [0, 112], sizes = [1, 16], strides = [1, 1]} : vector<1x128xf32> to vector<1x16xf32>
      %70 = arith.addf %68, %69 : vector<1x16xf32>
      %c0_35 = arith.constant 0 : index
      %c0_36 = arith.constant 0 : index
      %71 = vector.load %arg5[%c0_35, %c0_36] : memref<1x128xf32, #tpu.memory_space<vmem>>, vector<1x128xf32>
      %cst_37 = arith.constant dense<0.000000e+00> : vector<128xf32>
      %72 = vector.multi_reduction <add>, %71, %cst_37 [0] : vector<1x128xf32> to vector<128xf32>
      %73 = vector.shape_cast %72 : vector<128xf32> to vector<1x128xf32>
      %74 = vector.extract_strided_slice %73 {offsets = [0, 0], sizes = [1, 16], strides = [1, 1]} : vector<1x128xf32> to vector<1x16xf32>
      %75 = vector.extract_strided_slice %73 {offsets = [0, 16], sizes = [1, 16], strides = [1, 1]} : vector<1x128xf32> to vector<1x16xf32>
      %76 = arith.addf %74, %75 : vector<1x16xf32>
      %77 = vector.extract_strided_slice %73 {offsets = [0, 32], sizes = [1, 16], strides = [1, 1]} : vector<1x128xf32> to vector<1x16xf32>
      %78 = arith.addf %76, %77 : vector<1x16xf32>
      %79 = vector.extract_strided_slice %73 {offsets = [0, 48], sizes = [1, 16], strides = [1, 1]} : vector<1x128xf32> to vector<1x16xf32>
      %80 = arith.addf %78, %79 : vector<1x16xf32>
      %81 = vector.extract_strided_slice %73 {offsets = [0, 64], sizes = [1, 16], strides = [1, 1]} : vector<1x128xf32> to vector<1x16xf32>
      %82 = arith.addf %80, %81 : vector<1x16xf32>
      %83 = vector.extract_strided_slice %73 {offsets = [0, 80], sizes = [1, 16], strides = [1, 1]} : vector<1x128xf32> to vector<1x16xf32>
      %84 = arith.addf %82, %83 : vector<1x16xf32>
      %85 = vector.extract_strided_slice %73 {offsets = [0, 96], sizes = [1, 16], strides = [1, 1]} : vector<1x128xf32> to vector<1x16xf32>
      %86 = arith.addf %84, %85 : vector<1x16xf32>
      %87 = vector.extract_strided_slice %73 {offsets = [0, 112], sizes = [1, 16], strides = [1, 1]} : vector<1x128xf32> to vector<1x16xf32>
      %88 = arith.addf %86, %87 : vector<1x16xf32>
      %c0_38 = arith.constant 0 : index
      %c0_39 = arith.constant 0 : index
      %89 = vector.load %arg6[%c0_38, %c0_39] : memref<1x128xf32, #tpu.memory_space<vmem>>, vector<1x128xf32>
      %cst_40 = arith.constant dense<0.000000e+00> : vector<128xf32>
      %90 = vector.multi_reduction <add>, %89, %cst_40 [0] : vector<1x128xf32> to vector<128xf32>
      %91 = vector.shape_cast %90 : vector<128xf32> to vector<1x128xf32>
      %92 = vector.extract_strided_slice %91 {offsets = [0, 0], sizes = [1, 16], strides = [1, 1]} : vector<1x128xf32> to vector<1x16xf32>
      %93 = vector.extract_strided_slice %91 {offsets = [0, 16], sizes = [1, 16], strides = [1, 1]} : vector<1x128xf32> to vector<1x16xf32>
      %94 = arith.addf %92, %93 : vector<1x16xf32>
      %95 = vector.extract_strided_slice %91 {offsets = [0, 32], sizes = [1, 16], strides = [1, 1]} : vector<1x128xf32> to vector<1x16xf32>
      %96 = arith.addf %94, %95 : vector<1x16xf32>
      %97 = vector.extract_strided_slice %91 {offsets = [0, 48], sizes = [1, 16], strides = [1, 1]} : vector<1x128xf32> to vector<1x16xf32>
      %98 = arith.addf %96, %97 : vector<1x16xf32>
      %99 = vector.extract_strided_slice %91 {offsets = [0, 64], sizes = [1, 16], strides = [1, 1]} : vector<1x128xf32> to vector<1x16xf32>
      %100 = arith.addf %98, %99 : vector<1x16xf32>
      %101 = vector.extract_strided_slice %91 {offsets = [0, 80], sizes = [1, 16], strides = [1, 1]} : vector<1x128xf32> to vector<1x16xf32>
      %102 = arith.addf %100, %101 : vector<1x16xf32>
      %103 = vector.extract_strided_slice %91 {offsets = [0, 96], sizes = [1, 16], strides = [1, 1]} : vector<1x128xf32> to vector<1x16xf32>
      %104 = arith.addf %102, %103 : vector<1x16xf32>
      %105 = vector.extract_strided_slice %91 {offsets = [0, 112], sizes = [1, 16], strides = [1, 1]} : vector<1x128xf32> to vector<1x16xf32>
      %106 = arith.addf %104, %105 : vector<1x16xf32>
      %c0_41 = arith.constant 0 : index
      %c0_42 = arith.constant 0 : index
      %107 = vector.load %arg7[%c0_41, %c0_42] : memref<1x128xf32, #tpu.memory_space<vmem>>, vector<1x128xf32>
      %cst_43 = arith.constant dense<0.000000e+00> : vector<128xf32>
      %108 = vector.multi_reduction <add>, %107, %cst_43 [0] : vector<1x128xf32> to vector<128xf32>
      %109 = vector.shape_cast %108 : vector<128xf32> to vector<1x128xf32>
      %110 = vector.extract_strided_slice %109 {offsets = [0, 0], sizes = [1, 16], strides = [1, 1]} : vector<1x128xf32> to vector<1x16xf32>
      %111 = vector.extract_strided_slice %109 {offsets = [0, 16], sizes = [1, 16], strides = [1, 1]} : vector<1x128xf32> to vector<1x16xf32>
      %112 = arith.addf %110, %111 : vector<1x16xf32>
      %113 = vector.extract_strided_slice %109 {offsets = [0, 32], sizes = [1, 16], strides = [1, 1]} : vector<1x128xf32> to vector<1x16xf32>
      %114 = arith.addf %112, %113 : vector<1x16xf32>
      %115 = vector.extract_strided_slice %109 {offsets = [0, 48], sizes = [1, 16], strides = [1, 1]} : vector<1x128xf32> to vector<1x16xf32>
      %116 = arith.addf %114, %115 : vector<1x16xf32>
      %117 = vector.extract_strided_slice %109 {offsets = [0, 64], sizes = [1, 16], strides = [1, 1]} : vector<1x128xf32> to vector<1x16xf32>
      %118 = arith.addf %116, %117 : vector<1x16xf32>
      %119 = vector.extract_strided_slice %109 {offsets = [0, 80], sizes = [1, 16], strides = [1, 1]} : vector<1x128xf32> to vector<1x16xf32>
      %120 = arith.addf %118, %119 : vector<1x16xf32>
      %121 = vector.extract_strided_slice %109 {offsets = [0, 96], sizes = [1, 16], strides = [1, 1]} : vector<1x128xf32> to vector<1x16xf32>
      %122 = arith.addf %120, %121 : vector<1x16xf32>
      %123 = vector.extract_strided_slice %109 {offsets = [0, 112], sizes = [1, 16], strides = [1, 1]} : vector<1x128xf32> to vector<1x16xf32>
      %124 = arith.addf %122, %123 : vector<1x16xf32>
      %cst_44 = arith.constant 0.000000e+00 : f32
      %125 = vector.broadcast %cst_44 : f32 to vector<1x16xf32>
      %126 = arith.cmpf oeq, %70, %125 : vector<1x16xf32>
      %127 = arith.extui %126 : vector<1x16xi1> to vector<1x16xi32>
      %128 = arith.sitofp %127 : vector<1x16xi32> to vector<1x16xf32>
      %129 = vector.shape_cast %128 : vector<1x16xf32> to vector<1x1x16xf32>
      %cst_45 = arith.constant dense<0.000000e+00> : vector<1xf32>
      %130 = vector.multi_reduction <add>, %129, %cst_45 [1, 2] : vector<1x1x16xf32> to vector<1xf32>
      %131 = vector.shape_cast %130 : vector<1xf32> to vector<1x1x1xf32>
      %132 = vector.extract %131[0, 0, 0] : f32 from vector<1x1x1xf32>
      %133 = arith.mulf %88, %128 : vector<1x16xf32>
      %134 = vector.shape_cast %133 : vector<1x16xf32> to vector<1x1x16xf32>
      %cst_46 = arith.constant dense<0.000000e+00> : vector<1xf32>
      %135 = vector.multi_reduction <add>, %134, %cst_46 [1, 2] : vector<1x1x16xf32> to vector<1xf32>
      %136 = vector.shape_cast %135 : vector<1xf32> to vector<1x1x1xf32>
      %137 = vector.extract %136[0, 0, 0] : f32 from vector<1x1x1xf32>
      %cst_47 = arith.constant 0.000000e+00 : f32
      %138 = arith.cmpf ogt, %132, %cst_47 : f32
      %cst_48 = arith.constant 8.000000e+00 : f32
      %139 = arith.mulf %cst_48, %132 : f32
      %cst_49 = arith.constant 1.000000e+00 : f32
      %140 = arith.maximumf %139, %cst_49 : f32
      %141 = arith.divf %137, %140 : f32
      %cst_50 = arith.constant 0.000000e+00 : f32
      %142 = arith.select %138, %141, %cst_50 : f32
      %cst_51 = arith.constant 9.99999993E-9 : f32
      %143 = vector.broadcast %cst_51 : f32 to vector<1x16xf32>
      %144 = arith.addf %106, %143 : vector<1x16xf32>
      %145 = arith.divf %124, %144 : vector<1x16xf32>
      %cst_52 = arith.constant 9.99999993E-9 : f32
      %146 = vector.broadcast %cst_52 : f32 to vector<1x16xf32>
      %147 = arith.addf %70, %146 : vector<1x16xf32>
      %148 = arith.divf %124, %147 : vector<1x16xf32>
      %149 = arith.mulf %145, %148 : vector<1x16xf32>
      %150 = arith.addf %145, %148 : vector<1x16xf32>
      %cst_53 = arith.constant 9.99999993E-9 : f32
      %151 = vector.broadcast %cst_53 : f32 to vector<1x16xf32>
      %152 = arith.addf %150, %151 : vector<1x16xf32>
      %153 = arith.divf %149, %152 : vector<1x16xf32>
      %cst_54 = arith.constant 2.000000e+00 : f32
      %154 = vector.broadcast %cst_54 : f32 to vector<1x16xf32>
      %155 = arith.mulf %154, %153 : vector<1x16xf32>
      %156 = vector.shape_cast %155 : vector<1x16xf32> to vector<1x1x16xf32>
      %cst_55 = arith.constant dense<0.000000e+00> : vector<1xf32>
      %157 = vector.multi_reduction <add>, %156, %cst_55 [1, 2] : vector<1x1x16xf32> to vector<1xf32>
      %158 = vector.shape_cast %157 : vector<1xf32> to vector<1x1x1xf32>
      %159 = vector.extract %158[0, 0, 0] : f32 from vector<1x1x1xf32>
      %cst_56 = arith.constant 1.600000e+01 : f32
      %160 = arith.divf %159, %cst_56 : f32
      %cst_57 = arith.constant 1.000000e+00 : f32
      %161 = arith.subf %cst_57, %160 : f32
      %162 = arith.addf %161, %142 : f32
      %c0_58 = arith.constant 0 : index
      %c0_59 = arith.constant 0 : index
      %163 = memref.load %arg3[%c0_58, %c0_59] : memref<1x1xf32, #tpu.memory_space<smem>>
      memref.store %162, %arg3[%c0_58, %c0_59] : memref<1x1xf32, #tpu.memory_space<smem>>
    } else {
    }
    return
  }
  func.func @transform_0(%arg0: i32) -> (i32, i32) {
    %c0_i32 = arith.constant 0 : i32
    %c0_i32_0 = arith.constant 0 : i32
    return %arg0, %c0_i32 : i32, i32
  }
  func.func @transform_1(%arg0: i32) -> (i32, i32) {
    %c0_i32 = arith.constant 0 : i32
    %c0_i32_0 = arith.constant 0 : i32
    return %arg0, %c0_i32 : i32, i32
  }
  func.func @transform_2(%arg0: i32) -> (i32, i32) {
    %c0_i32 = arith.constant 0 : i32
    %c0_i32_0 = arith.constant 0 : i32
    %c0_i32_1 = arith.constant 0 : i32
    return %c0_i32, %c0_i32_0 : i32, i32
  }
}

</mosaic_0001>

<llo_original>
// kernel: tpu_custom_call.1
$region0: #{tpu_custom_call.1}
  #allocation0 [shape = 'u32[]', space=smem, size = 0x4, offset = 0x4, fixed_abs, tag = 'smem constant byte address 0x4 - core index']
  #allocation1 [shape = 'u32[144,128]{1,0:T(1,128)}', space=vmem, size = 0x12000, scoped, tag = 'internal scratch']
  #allocation2 [shape = 'f32[1,128]{1,0:T(1,128)}', space=vmem, size = 0x200, scoped, tag = 'scratch operand']
  #allocation3 [shape = 'f32[1,128]{1,0:T(1,128)}', space=vmem, size = 0x200, scoped, tag = 'scratch operand']
  #allocation4 [shape = 'f32[1,128]{1,0:T(1,128)}', space=vmem, size = 0x200, scoped, tag = 'scratch operand']
  #allocation5 [shape = 'f32[1,128]{1,0:T(1,128)}', space=vmem, size = 0x200, scoped, tag = 'scratch operand']
  %s0 = inlined_call_operand.hbm [shape: f32[1,128], index: 0, kind: input, shape index: {}]
  %s1 = inlined_call_operand.vmem [shape: f32[1,128], index: 1, kind: input, shape index: {}]
  %s2 = inlined_call_operand.hbm [shape: f32[1,1], index: 2, kind: output, shape index: {}]
  %s3 = sld [smem:[#allocation0]]
  $region30: #{tpu_custom_call.1} parent=0
    _
  %s5 = ssub.s32 1, %s3
  %s6 = scalar_select 0, %s5, %s3
  $region1: #{tpu_custom_call.1} parent=0
    #allocation6 [shape = 'u8[512]{0}', space=vmem, size = 0x400, scoped, tag = 'input window, operand 0, single buffered']
    #allocation7 [shape = 's32[1]{0}', space=sflag, size = 0x4, scoped, tag = 'scoped memory for tpu_custom_call.1']
    #allocation8 [shape = 's32[1]{0}', space=sflag, size = 0x4, scoped, tag = 'scoped memory for tpu_custom_call.1']
    #allocation9 [shape = 'u8[512]{0}', space=smem, size = 0x200, scoped, tag = 'output window, operand 0, single buffered']
    %7 = vsyncpa [#allocation7], 0
    %8 = vsyncpa [#allocation8], 0
    // Predicated region
    $region2: #{tpu_custom_call.1} parent=1 // pred_check
      _
    $region3: #{tpu_custom_call.1} parent=1 // pred_check_branch
      %10 = sbr.rel (0) target = $region5
    $region4: #{tpu_custom_call.1} parent=1 // pred_region
      %s12 = ssub.s32 16, 16
      %13 = vsyncadd [#allocation7], %s12
      %s15 = sshll.u32 [#allocation6], 4
      %s16 = int_to_ptr.vmem [resolvable:$true] %s15
      %18 = dma.hbm_to_vmem [thread:$0]  %s0, 16, %s16, [#allocation7]
    $region5: #{tpu_custom_call.1} parent=1 // pred_fallthru
      _
    // Predicated region
    $region6: #{tpu_custom_call.1} parent=1 // pred_check
      _
    $region7: #{tpu_custom_call.1} parent=1 // pred_check_branch
      %20 = sbr.rel (0) target = $region9
    $region8: #{tpu_custom_call.1} parent=1 // pred_region
      _
    $region9: #{tpu_custom_call.1} parent=1 // pred_fallthru
      _
    // Predicated region
    $region10: #{tpu_custom_call.1} parent=1 // pred_check
      _
    $region11: #{tpu_custom_call.1} parent=1 // pred_check_branch
      %22 = sbr.rel (0) target = $region13
    $region12: #{tpu_custom_call.1} parent=1 // pred_region
      %23 = dma.done [#allocation7], 16
    $region13: #{tpu_custom_call.1} parent=1 // pred_fallthru
      _
    %p24 = scmp.eq.s32.totalorder 0, 0
    // Predicated region
    $region14: #{tpu_custom_call.1} parent=1 // pred_check
      %p25 = pneg %p24
    $region15: #{tpu_custom_call.1} parent=1 // pred_check_branch
      %27 = sbr.rel (%p25) target = $region17
    $region16: #{tpu_custom_call.1} parent=1 // pred_region
      %28 = vst [vmem:[#allocation2] sm:$0x1] 0.0
      %29 = vst [vmem:[#allocation3] sm:$0x1] 0.0
      %30 = vst [vmem:[#allocation4] sm:$0x1] 0.0
      %31 = vst [vmem:[#allocation5] sm:$0x1] 0.0
    $region17: #{tpu_custom_call.1} parent=1 // pred_fallthru
      _
    %v32 = vld [vmem:[#allocation6] sm:$0x1]
    %v33 = vld [vmem:[%s1] sm:$0x1]
    %v34 = vand.u32 2147483647, %v32
    %v35 = vsub.f32 0.0, %v34
    %v36 = vmul.f32 %v35, 1.442695
    %v37 = vpow.pop %v36
    %v38 = vmax.f32 %v32, 0.0
    %v39 = vmul.f32 %v32, %v33
    %v40 = vsub.f32 %v38, %v39
    %v41 = vadd.f32 %v37, 1.0
    %v42 = vlog2.pop %v41
    %v43 = vmul.f32 %v42, 0.6931472
    %v44 = vmul.f32 -0.5, %v37
    %v45 = vadd.f32 %v44, 1.0
    %v46 = vmul.f32 %v45, %v37
    %v47 = vand.u32 2147483647, %v37
    %vm48 = vcmp.lt.f32.partialorder %v47, 0.0004427343
    %v49 = vsel %vm48, %v46, %v43
    %v50 = vadd.f32 %v40, %v49
    %v51 = vadd.f32 %v37, 1.0
    %v52 = vrcp.pop %v51
    %vm53 = vcmp.ge.f32.partialorder %v32, 0.0
    %v54 = vmul.f32 %v37, %v52
    %v55 = vsel %vm53, %v52, %v54
    %vm56 = vcmp.gt.f32.partialorder %v33, 0.0
    %v57 = vadd.f32 %v55, 0.01
    %v58 = vmax.f32 %v55, 0.01
    %v59 = vsel %vm56, %v57, %v58
    %v60 = vld [vmem:[#allocation2] sm:$0x1]
    %v61 = vadd.f32 %v33, 0.0
    %v62 = vadd.f32 %v60, %v61
    %63 = vst [vmem:[#allocation2] sm:$0x1] %v62
    %v64 = vld [vmem:[#allocation3] sm:$0x1]
    %v65 = vadd.f32 %v50, 0.0
    %v66 = vadd.f32 %v64, %v65
    %67 = vst [vmem:[#allocation3] sm:$0x1] %v66
    %v68 = vld [vmem:[#allocation4] sm:$0x1]
    %v69 = vadd.f32 %v59, 0.0
    %v70 = vadd.f32 %v68, %v69
    %71 = vst [vmem:[#allocation4] sm:$0x1] %v70
    %v72 = vld [vmem:[#allocation5] sm:$0x1]
    %v73 = vmul.f32 %v59, %v33
    %v74 = vadd.f32 %v73, 0.0
    %v75 = vadd.f32 %v72, %v74
    %76 = vst [vmem:[#allocation5] sm:$0x1] %v75
    // Predicated region
    $region18: #{tpu_custom_call.1} parent=1 // pred_check
      %p77 = pneg %p24
    $region19: #{tpu_custom_call.1} parent=1 // pred_check_branch
      %79 = sbr.rel (%p77) target = $region21
    $region20: #{tpu_custom_call.1} parent=1 // pred_region
      %v80 = vld [vmem:[#allocation2] sm:$0x1]
      %v81 = vadd.f32 %v80, 0.0
      %83 = vrot.lane.b32.xlu0 %v81, 112
      %v84 = vpop.permute.xlu0 %83
      %v86 = vadd.f32 %v81, %v84
      %87 = vrot.lane.b32.xlu0 %v81, 96
      %v88 = vpop.permute.xlu0 %87
      %v90 = vadd.f32 %v86, %v88
      %91 = vrot.lane.b32.xlu0 %v81, 80
      %v92 = vpop.permute.xlu0 %91
      %v94 = vadd.f32 %v90, %v92
      %95 = vrot.lane.b32.xlu0 %v81, 64
      %v96 = vpop.permute.xlu0 %95
      %v98 = vadd.f32 %v94, %v96
      %99 = vrot.lane.b32.xlu0 %v81, 48
      %v100 = vpop.permute.xlu0 %99
      %v102 = vadd.f32 %v98, %v100
      %103 = vrot.lane.b32.xlu0 %v81, 32
      %v104 = vpop.permute.xlu0 %103
      %v106 = vadd.f32 %v102, %v104
      %107 = vrot.lane.b32.xlu0 %v81, 16
      %v108 = vpop.permute.xlu0 %107
      %v110 = vadd.f32 %v106, %v108
      %v111 = vld [vmem:[#allocation3] sm:$0x1]
      %v112 = vadd.f32 %v111, 0.0
      %114 = vrot.lane.b32.xlu0 %v112, 112
      %v115 = vpop.permute.xlu0 %114
      %v117 = vadd.f32 %v112, %v115
      %118 = vrot.lane.b32.xlu0 %v112, 96
      %v119 = vpop.permute.xlu0 %118
      %v121 = vadd.f32 %v117, %v119
      %122 = vrot.lane.b32.xlu0 %v112, 80
      %v123 = vpop.permute.xlu0 %122
      %v125 = vadd.f32 %v121, %v123
      %126 = vrot.lane.b32.xlu0 %v112, 64
      %v127 = vpop.permute.xlu0 %126
      %v129 = vadd.f32 %v125, %v127
      %130 = vrot.lane.b32.xlu0 %v112, 48
      %v131 = vpop.permute.xlu0 %130
      %v133 = vadd.f32 %v129, %v131
      %134 = vrot.lane.b32.xlu0 %v112, 32
      %v135 = vpop.permute.xlu0 %134
      %v137 = vadd.f32 %v133, %v135
      %138 = vrot.lane.b32.xlu0 %v112, 16
      %v139 = vpop.permute.xlu0 %138
      %v141 = vadd.f32 %v137, %v139
      %v142 = vld [vmem:[#allocation4] sm:$0x1]
      %v143 = vadd.f32 %v142, 0.0
      %145 = vrot.lane.b32.xlu0 %v143, 112
      %v146 = vpop.permute.xlu0 %145
      %v148 = vadd.f32 %v143, %v146
      %149 = vrot.lane.b32.xlu0 %v143, 96
      %v150 = vpop.permute.xlu0 %149
      %v152 = vadd.f32 %v148, %v150
      %153 = vrot.lane.b32.xlu0 %v143, 80
      %v154 = vpop.permute.xlu0 %153
      %v156 = vadd.f32 %v152, %v154
      %157 = vrot.lane.b32.xlu0 %v143, 64
      %v158 = vpop.permute.xlu0 %157
      %v160 = vadd.f32 %v156, %v158
      %161 = vrot.lane.b32.xlu0 %v143, 48
      %v162 = vpop.permute.xlu0 %161
      %v164 = vadd.f32 %v160, %v162
      %165 = vrot.lane.b32.xlu0 %v143, 32
      %v166 = vpop.permute.xlu0 %165
      %v168 = vadd.f32 %v164, %v166
      %169 = vrot.lane.b32.xlu0 %v143, 16
      %v170 = vpop.permute.xlu0 %169
      %v172 = vadd.f32 %v168, %v170
      %v173 = vld [vmem:[#allocation5] sm:$0x1]
      %v174 = vadd.f32 %v173, 0.0
      %176 = vrot.lane.b32.xlu0 %v174, 112
      %v177 = vpop.permute.xlu0 %176
      %v179 = vadd.f32 %v174, %v177
      %180 = vrot.lane.b32.xlu0 %v174, 96
      %v181 = vpop.permute.xlu0 %180
      %v183 = vadd.f32 %v179, %v181
      %184 = vrot.lane.b32.xlu0 %v174, 80
      %v185 = vpop.permute.xlu0 %184
      %v187 = vadd.f32 %v183, %v185
      %188 = vrot.lane.b32.xlu0 %v174, 64
      %v189 = vpop.permute.xlu0 %188
      %v191 = vadd.f32 %v187, %v189
      %192 = vrot.lane.b32.xlu0 %v174, 48
      %v193 = vpop.permute.xlu0 %192
      %v195 = vadd.f32 %v191, %v193
      %196 = vrot.lane.b32.xlu0 %v174, 32
      %v197 = vpop.permute.xlu0 %196
      %v199 = vadd.f32 %v195, %v197
      %200 = vrot.lane.b32.xlu0 %v174, 16
      %v201 = vpop.permute.xlu0 %200
      %v203 = vadd.f32 %v199, %v201
      %vm204 = vcmp.eq.f32.partialorder %v110, 0.0
      %v205 = vsel %vm204, 1, 0
      %v206 = vcvt.s32.f32 %v205
      %vm207 = vcmask 122880
      %v208 = vsel %vm207, %v206, 0.0
      %209 = vadd.xlane.f32.xlu0 %v208
      %v210 = vpop.xlane.xlu0 %209
      %v211 = vrot.slane %v210, 4
      %v212 = vadd.f32 %v210, %v211
      %v213 = vrot.slane %v212, 2
      %v214 = vadd.f32 %v212, %v213
      %v215 = vrot.slane %v214, 1
      %v216 = vadd.f32 %v214, %v215
      %s217 = vtos %v216
      %v218 = vmul.f32 %v141, %v206
      %v219 = vsel %vm207, %v218, 0.0
      %220 = vadd.xlane.f32.xlu0 %v219
      %v221 = vpop.xlane.xlu0 %220
      %v222 = vrot.slane %v221, 4
      %v223 = vadd.f32 %v221, %v222
      %v224 = vrot.slane %v223, 2
      %v225 = vadd.f32 %v223, %v224
      %v226 = vrot.slane %v225, 1
      %v227 = vadd.f32 %v225, %v226
      %s228 = vtos %v227
      %p229 = scmp.gt.f32.partialorder %s217, 0.0
      %s230 = smul.f32 %s217, 8.0
      %s231 = smax.f32 %s230, 1.0
      %v232 = vstv %s231
      %v233 = vrcp.pop %v232
      %s234 = vtos %v233
      %s235 = smul.f32 %s228, %s234
      %s236 = scalar_select %p229, %s235, 0.0
      %v237 = vadd.f32 %v172, 1e-08
      %v238 = vrcp.pop %v237
      %v239 = vmul.f32 %v203, %v238
      %v240 = vadd.f32 %v110, 1e-08
      %v241 = vrcp.pop %v240
      %v242 = vmul.f32 %v203, %v241
      %v243 = vmul.f32 %v239, %v242
      %v244 = vadd.f32 %v239, %v242
      %v245 = vadd.f32 %v244, 1e-08
      %v246 = vrcp.pop %v245
      %v247 = vmul.f32 %v243, %v246
      %v248 = vmul.f32 %v247, 2.0
      %v249 = vsel %vm207, %v248, 0.0
      %250 = vadd.xlane.f32.xlu0 %v249
      %v251 = vpop.xlane.xlu0 %250
      %v252 = vrot.slane %v251, 4
      %v253 = vadd.f32 %v251, %v252
      %v254 = vrot.slane %v253, 2
      %v255 = vadd.f32 %v253, %v254
      %v256 = vrot.slane %v255, 1
      %v257 = vadd.f32 %v255, %v256
      %s258 = vtos %v257
      %v259 = vrcp.pop 16.0
      %s260 = vtos %v259
      %s261 = smul.f32 %s258, %s260
      %s262 = ssub.f32 1.0, %s261
      %s263 = sadd.f32 %s262, %s236
      %s264 = scalar_lea.smem [#allocation9], 0
      %265 = sst [smem:[%s264]] %s263
    $region21: #{tpu_custom_call.1} parent=1 // pred_fallthru
      _
    // Predicated region
    $region22: #{tpu_custom_call.1} parent=1 // pred_check
      _
    $region23: #{tpu_custom_call.1} parent=1 // pred_check_branch
      %267 = sbr.rel (0) target = $region25
    $region24: #{tpu_custom_call.1} parent=1 // pred_region
      %s269 = ssub.s32 16, 16
      %270 = vsyncadd [#allocation8], %s269
      %273 = dma.smem_to_hbm [#allocation9], 16, %s2, [#allocation8]
    $region25: #{tpu_custom_call.1} parent=1 // pred_fallthru
      _
    // Predicated region
    $region26: #{tpu_custom_call.1} parent=1 // pred_check
      _
    $region27: #{tpu_custom_call.1} parent=1 // pred_check_branch
      %275 = sbr.rel (0) target = $region29
    $region28: #{tpu_custom_call.1} parent=1 // pred_region
      %276 = dma.done [#allocation8], 16
    $region29: #{tpu_custom_call.1} parent=1 // pred_fallthru
      _
    %277 = sfence
    %278 = vsyncpa [#allocation7], 1
    %279 = vsyncpa [#allocation8], 1

</llo_original>
